<compile_context>
chip_gen: v6e
topology: v6e:2x2x1
jax: 0.10.0
libtpu: 0.0.40
codegen_flags: <defaults>
</compile_context>

<pallas_src>
import functools

import jax
import jax.numpy as jnp
from jax import lax
from jax.experimental import pallas as pl
from jax.experimental.pallas import tpu as pltpu


# ---------------------------------------------------------------------------
# Kernel 1: fused all-head Q/K/V projection, once per batch element.
# ---------------------------------------------------------------------------
def _proj_kernel(xe_ref, xd_ref, wq_ref, wk_ref, wv_ref,
                 q_ref, k_ref, v_ref, *, num_heads, head_size):
    """grid=(B,).  Three wide matmuls (N = H*hs), f32 accumulation, written
    out head-major (H, T, hs).  The head-split relayout is paid ONCE per
    batch element here instead of 3*H times per q-tile in attention."""
    xe = xe_ref[0]                                   # (T_enc, E)
    xd = xd_ref[0]                                   # (T_dec, E)

    q_all = jnp.dot(xd, wq_ref[...], preferred_element_type=jnp.float32)
    k_all = jnp.dot(xe, wk_ref[...], preferred_element_type=jnp.float32)
    v_all = jnp.dot(xe, wv_ref[...], preferred_element_type=jnp.float32)

    for h in range(num_heads):                       # static; body = slice+store
        lo = h * head_size
        hi = lo + head_size
        q_ref[0, h] = q_all[:, lo:hi].astype(q_ref.dtype)
        k_ref[0, h] = k_all[:, lo:hi].astype(k_ref.dtype)
        v_ref[0, h] = v_all[:, lo:hi].astype(v_ref.dtype)


# ---------------------------------------------------------------------------
# Kernel 2: head-batched cross attention + output projection.
# ---------------------------------------------------------------------------
def _attn_kernel(q_ref, k_ref, v_ref, mask_ref, wp_ref, b_ref, out_ref, *,
                 head_size, approx_recip):
    """grid=(B, T_dec // tile_q), both axes parallel (no cross-step state)."""
    qh = q_ref[0]                                    # (H, tq,    hs)
    kh = k_ref[0]                                    # (H, T_enc, hs)
    vh = v_ref[0]                                    # (H, T_enc, hs)
    m = mask_ref[0]                                  # (tq, T_enc) int8

    scale = jnp.float32(head_size ** (-0.5))
    # Additive finite bias: masked logits underflow to exactly 0 after exp;
    # fully-masked rows degrade to a uniform distribution (reference: NaN).
    bias = jnp.where(m == 0, jnp.float32(-1e30), jnp.float32(0.0))

    # Scores for all heads at once (heads = dot_general batch dim);
    # contracts the hs axis of both operands -> no materialized K transpose.
    s = lax.dot_general(qh, kh, (((2,), (2,)), ((0,), (0,))),
                        preferred_element_type=jnp.float32)      # (H, tq, Te)
    s = s * scale + bias[None, :, :]

    # Numerically-stable softmax; normalization deferred past PV.
    s_max = jnp.max(s, axis=-1, keepdims=True)
    e = jnp.exp(s - s_max)
    denom = jnp.sum(e, axis=-1, keepdims=True)
    inv = pl.reciprocal(denom, approx=approx_recip)              # (H, tq, 1)

    pv = lax.dot_general(e.astype(vh.dtype), vh,
                         (((2,), (1,)), ((0,), (0,))),
                         preferred_element_type=jnp.float32)     # (H, tq, hs)
    pv = (pv * inv).astype(wp_ref.dtype)

    # Output projection, head-batched and TRANSPOSED: result has tq on lanes
    # (lane-dense store when tile_q >= 128) instead of E.
    proj_t = lax.dot_general(wp_ref[...], pv,
                             (((1,), (2,)), ((0,), (0,))),
                             preferred_element_type=jnp.float32)  # (H, E, tq)
    out_t = proj_t.sum(axis=0) + b_ref[...]                       # (E, tq)
    out_ref[0] = out_t.astype(out_ref.dtype)


# ---------------------------------------------------------------------------
# Wrapper
# ---------------------------------------------------------------------------
def _pick_tile_q(t_dec, cap):
    """Largest q tile that satisfies the lane-dense transposed-output layout:
    tile_q == T_dec, or tile_q a multiple of 128 dividing T_dec."""
    if t_dec <= cap:
        return t_dec
    start = cap - cap % 128
    for cand in range(start, 0, -128):
        if t_dec % cand == 0:
            return cand
    return t_dec  # no good divisor -> single full-T_dec tile


def multi_head_cross_attention(x_encode, x, mask, wq, wk, wv, w_proj, b_proj,
                               *, compute_dtype=jnp.float32, max_tile_q=128):
    """x_encode: [B,T_enc,E], x: [B,T_dec,E], mask: [B,T_dec,T_enc] (or None).
    wq/wk/wv: [H,E,hs], w_proj: [H*hs,E], b_proj: [1,E].
    compute_dtype=jnp.bfloat16 enables the bf16 MXU fast path (v6e/v7x);
    keep the f32 default on v5e."""
    B, T_enc, E = x_encode.shape
    _, T_dec, _ = x.shape
    H, _, hs = wq.shape

    cdt = jnp.dtype(compute_dtype)
    use_bf16 = cdt == jnp.dtype(jnp.bfloat16)

    # Wrapper-side weight prep (pre-cast: no per-grid-step in-kernel casts).
    wq_all = jnp.transpose(wq, (1, 0, 2)).reshape(E, H * hs).astype(cdt)
    wk_all = jnp.transpose(wk, (1, 0, 2)).reshape(E, H * hs).astype(cdt)
    wv_all = jnp.transpose(wv, (1, 0, 2)).reshape(E, H * hs).astype(cdt)
    wp3 = w_proj.reshape(H, hs, E).astype(cdt)          # per-head rows of W_proj
    b_col = b_proj.reshape(E, 1).astype(jnp.float32)    # bias added in f32

    xe_c = x_encode.astype(cdt)
    xd_c = x.astype(cdt)

    if mask is None:
        mask = jnp.ones((B, T_dec, T_enc), jnp.int8)
    mask_i8 = mask.astype(jnp.int8)                      # 4x fewer DMA bytes

    vmem_cap = 40 * 1024 * 1024                          # v7x-safe (64 MiB phys)

    # ---- 1) per-batch fused Q/K/V projection ------------------------------
    q_h, k_h, v_h = pl.pallas_call(
        functools.partial(_proj_kernel, num_heads=H, head_size=hs),
        out_shape=(
            jax.ShapeDtypeStruct((B, H, T_dec, hs), cdt),
            jax.ShapeDtypeStruct((B, H, T_enc, hs), cdt),
            jax.ShapeDtypeStruct((B, H, T_enc, hs), cdt),
        ),
        grid_spec=pltpu.PrefetchScalarGridSpec(
            num_scalar_prefetch=0,
            grid=(B,),
            in_specs=[
                pl.BlockSpec((1, T_enc, E), lambda b: (b, 0, 0)),   # x_encode
                pl.BlockSpec((1, T_dec, E), lambda b: (b, 0, 0)),   # x (decode)
                pl.BlockSpec((E, H * hs), lambda b: (0, 0)),        # Wq fused
                pl.BlockSpec((E, H * hs), lambda b: (0, 0)),        # Wk fused
                pl.BlockSpec((E, H * hs), lambda b: (0, 0)),        # Wv fused
            ],
            out_specs=[
                pl.BlockSpec((1, H, T_dec, hs), lambda b: (b, 0, 0, 0)),
                pl.BlockSpec((1, H, T_enc, hs), lambda b: (b, 0, 0, 0)),
                pl.BlockSpec((1, H, T_enc, hs), lambda b: (b, 0, 0, 0)),
            ],
        ),
        compiler_params=pltpu.CompilerParams(
            dimension_semantics=("parallel",),
            vmem_limit_bytes=vmem_cap,
        ),
    )(xe_c, xd_c, wq_all, wk_all, wv_all)

    # ---- 2) head-batched attention + output projection ---------------------
    tile_q = _pick_tile_q(T_dec, max_tile_q)
    n_q = T_dec // tile_q

    out_t = pl.pallas_call(
        functools.partial(_attn_kernel, head_size=hs, approx_recip=use_bf16),
        out_shape=jax.ShapeDtypeStruct((B, E, T_dec), x.dtype),
        grid_spec=pltpu.PrefetchScalarGridSpec(
            num_scalar_prefetch=0,
            grid=(B, n_q),
            in_specs=[
                pl.BlockSpec((1, H, tile_q, hs), lambda b, q: (b, 0, q, 0)),   # Q
                pl.BlockSpec((1, H, T_enc, hs), lambda b, q: (b, 0, 0, 0)),    # K
                pl.BlockSpec((1, H, T_enc, hs), lambda b, q: (b, 0, 0, 0)),    # V
                pl.BlockSpec((1, tile_q, T_enc), lambda b, q: (b, q, 0)),      # mask
                pl.BlockSpec((H, hs, E), lambda b, q: (0, 0, 0)),              # W_proj
                pl.BlockSpec((E, 1), lambda b, q: (0, 0)),                     # b_proj
            ],
            out_specs=pl.BlockSpec((1, E, tile_q), lambda b, q: (b, 0, q)),
        ),
        compiler_params=pltpu.CompilerParams(
            dimension_semantics=("parallel", "parallel"),
            vmem_limit_bytes=vmem_cap,
        ),
    )(q_h, k_h, v_h, mask_i8, wp3, b_col)

    # Transposed (B, E, T_dec) -> (B, T_dec, E): layout plumbing in XLA.
    return jnp.swapaxes(out_t, 1, 2)


# ---------------------------------------------------------------------------
# Pure-JAX reference mirroring the PyTorch forward exactly.
# ---------------------------------------------------------------------------
def _reference(x_encode, x, mask, wq, wk, wv, w_proj, b_proj):
    H, E, hs = wq.shape
    outs = []
    for h in range(H):
        k = x_encode @ wk[h]
        q = x @ wq[h]
        v = x_encode @ wv[h]
        wei = (q @ jnp.swapaxes(k, -2, -1)) * (hs ** -0.5)
        wei = jnp.where(mask == 0, -jnp.inf, wei)
        wei = jax.nn.softmax(wei, axis=-1)
        outs.append(wei @ v)
    cat = jnp.concatenate(outs, axis=-1)
    return cat @ w_proj + b_proj[0]


if __name__ == "__main__":
    # Small shapes consistent with the module.
    B, T_enc, T_dec = 2, 16, 8
    n_embd, num_heads, head_size = 32, 4, 16

    key = jax.random.PRNGKey(0)
    ks = jax.random.split(key, 8)

    x_encode = jax.random.normal(ks[0], (B, T_enc, n_embd), jnp.float32)
    x_decode = jax.random.normal(ks[1], (B, T_dec, n_embd), jnp.float32)

    # mask: 1 = keep, 0 = masked; every query row keeps at least one key.
    i = jnp.arange(T_dec)[:, None]
    j = jnp.arange(T_enc)[None, :]
    mask = jnp.broadcast_to((j <= i).astype(jnp.int32), (B, T_dec, T_enc))

    # Deterministic parameter init (nn.Linear-style uniform bounds).
    def uniform(k, shape, fan_in):
        bound = 1.0 / (fan_in ** 0.5)
        return jax.random.uniform(k, shape, jnp.float32, -bound, bound)

    wq = uniform(ks[2], (num_heads, n_embd, head_size), n_embd)
    wk = uniform(ks[3], (num_heads, n_embd, head_size), n_embd)
    wv = uniform(ks[4], (num_heads, n_embd, head_size), n_embd)
    w_proj = uniform(ks[5], (num_heads * head_size, n_embd), num_heads * head_size)
    b_proj = uniform(ks[6], (1, n_embd), num_heads * head_size)

    ref = _reference(x_encode, x_decode, mask, wq, wk, wv, w_proj, b_proj)

    # f32 path (default): exact EUP reciprocal; tolerance only absorbs
    # MXU-vs-XLA default matmul precision differences.
    out = multi_head_cross_attention(
        x_encode, x_decode, mask, wq, wk, wv, w_proj, b_proj)
    out = jax.block_until_ready(out)
    assert out.shape == (B, T_dec, n_embd)
    assert jnp.allclose(out, ref, atol=2e-3, rtol=2e-3), "f32 mismatch vs reference"

    # bf16 MXU fast path (v6e/v7x): weights/activations pre-cast to bf16 in
    # the wrapper, f32 accumulation, approximate reciprocal.
    out_bf16 = multi_head_cross_attention(
        x_encode, x_decode, mask, wq, wk, wv, w_proj, b_proj,
        compute_dtype=jnp.bfloat16)
    out_bf16 = jax.block_until_ready(out_bf16)
    assert jnp.allclose(out_bf16, ref, atol=5e-2, rtol=5e-2), "bf16 mismatch vs reference"

    print("KERNEL_OK")
</pallas_src>

<mosaic_0001>
module attributes {stable_mosaic.version = 11 : i64} {
  func.func @_proj_kernel(%arg0: i32, %arg1: memref<1x16x32xf32, #tpu.memory_space<vmem>>, %arg2: memref<1x8x32xf32, #tpu.memory_space<vmem>>, %arg3: memref<32x64xf32, #tpu.memory_space<vmem>>, %arg4: memref<32x64xf32, #tpu.memory_space<vmem>>, %arg5: memref<32x64xf32, #tpu.memory_space<vmem>>, %arg6: memref<1x4x8x16xf32, #tpu.memory_space<vmem>>, %arg7: memref<1x4x16x16xf32, #tpu.memory_space<vmem>>, %arg8: memref<1x4x16x16xf32, #tpu.memory_space<vmem>>) attributes {dimension_semantics = [#tpu.dimension_semantics<parallel>], iteration_bounds = array<i64: 2>, scalar_prefetch = 0 : i64, scratch_operands = 0 : i64, tpu.core_type = #tpu.core_type<tc>, window_params = [{transform_indices = @transform_0, window_bounds = array<i64: 1, 16, 32>}, {transform_indices = @transform_1, window_bounds = array<i64: 1, 8, 32>}, {pipeline_mode = #tpu.pipeline_mode<synchronous>, transform_indices = @transform_2, window_bounds = array<i64: 32, 64>}, {pipeline_mode = #tpu.pipeline_mode<synchronous>, transform_indices = @transform_3, window_bounds = array<i64: 32, 64>}, {pipeline_mode = #tpu.pipeline_mode<synchronous>, transform_indices = @transform_4, window_bounds = array<i64: 32, 64>}, {transform_indices = @transform_5, window_bounds = array<i64: 1, 4, 8, 16>}, {transform_indices = @transform_6, window_bounds = array<i64: 1, 4, 16, 16>}, {transform_indices = @transform_7, window_bounds = array<i64: 1, 4, 16, 16>}]} {
    %c0 = arith.constant 0 : index
    %c0_0 = arith.constant 0 : index
    %c0_1 = arith.constant 0 : index
    %0 = vector.load %arg1[%c0, %c0_0, %c0_1] : memref<1x16x32xf32, #tpu.memory_space<vmem>>, vector<1x16x32xf32>
    %1 = vector.shape_cast %0 : vector<1x16x32xf32> to vector<16x32xf32>
    %c0_2 = arith.constant 0 : index
    %c0_3 = arith.constant 0 : index
    %c0_4 = arith.constant 0 : index
    %2 = vector.load %arg2[%c0_2, %c0_3, %c0_4] : memref<1x8x32xf32, #tpu.memory_space<vmem>>, vector<1x8x32xf32>
    %3 = vector.shape_cast %2 : vector<1x8x32xf32> to vector<8x32xf32>
    %c0_5 = arith.constant 0 : index
    %c0_6 = arith.constant 0 : index
    %4 = vector.load %arg3[%c0_5, %c0_6] : memref<32x64xf32, #tpu.memory_space<vmem>>, vector<32x64xf32>
    %cst = arith.constant dense<0.000000e+00> : vector<8x64xf32>
    %5 = tpu.matmul %3, %4, %cst {dimension_numbers = #tpu.dot_dimension_numbers<[1], [0], [0], [1], [0, 0, 1, 1], [], []>} : vector<8x32xf32>, vector<32x64xf32>, vector<8x64xf32> -> vector<8x64xf32>
    %c0_7 = arith.constant 0 : index
    %c0_8 = arith.constant 0 : index
    %6 = vector.load %arg4[%c0_7, %c0_8] : memref<32x64xf32, #tpu.memory_space<vmem>>, vector<32x64xf32>
    %cst_9 = arith.constant dense<0.000000e+00> : vector<16x64xf32>
    %7 = tpu.matmul %1, %6, %cst_9 {dimension_numbers = #tpu.dot_dimension_numbers<[1], [0], [0], [1], [0, 0, 1, 1], [], []>} : vector<16x32xf32>, vector<32x64xf32>, vector<16x64xf32> -> vector<16x64xf32>
    %c0_10 = arith.constant 0 : index
    %c0_11 = arith.constant 0 : index
    %8 = vector.load %arg5[%c0_10, %c0_11] : memref<32x64xf32, #tpu.memory_space<vmem>>, vector<32x64xf32>
    %cst_12 = arith.constant dense<0.000000e+00> : vector<16x64xf32>
    %9 = tpu.matmul %1, %8, %cst_12 {dimension_numbers = #tpu.dot_dimension_numbers<[1], [0], [0], [1], [0, 0, 1, 1], [], []>} : vector<16x32xf32>, vector<32x64xf32>, vector<16x64xf32> -> vector<16x64xf32>
    %10 = vector.extract_strided_slice %5 {offsets = [0, 0], sizes = [8, 16], strides = [1, 1]} : vector<8x64xf32> to vector<8x16xf32>
    %c0_13 = arith.constant 0 : index
    %c0_14 = arith.constant 0 : index
    %c0_15 = arith.constant 0 : index
    %c0_16 = arith.constant 0 : index
    %11 = vector.load %arg6[%c0_13, %c0_14, %c0_15, %c0_16] : memref<1x4x8x16xf32, #tpu.memory_space<vmem>>, vector<1x1x8x16xf32>
    %12 = vector.shape_cast %11 : vector<1x1x8x16xf32> to vector<8x16xf32>
    %13 = vector.shape_cast %10 : vector<8x16xf32> to vector<1x1x8x16xf32>
    tpu.vector_store %arg6[%c0_13, %c0_14, %c0_15, %c0_16], %13 {strides = array<i32>} : memref<1x4x8x16xf32, #tpu.memory_space<vmem>>, vector<1x1x8x16xf32>,
    %14 = vector.extract_strided_slice %7 {offsets = [0, 0], sizes = [16, 16], strides = [1, 1]} : vector<16x64xf32> to vector<16x16xf32>
    %c0_17 = arith.constant 0 : index
    %c0_18 = arith.constant 0 : index
    %c0_19 = arith.constant 0 : index
    %c0_20 = arith.constant 0 : index
    %15 = vector.load %arg7[%c0_17, %c0_18, %c0_19, %c0_20] : memref<1x4x16x16xf32, #tpu.memory_space<vmem>>, vector<1x1x16x16xf32>
    %16 = vector.shape_cast %15 : vector<1x1x16x16xf32> to vector<16x16xf32>
    %17 = vector.shape_cast %14 : vector<16x16xf32> to vector<1x1x16x16xf32>
    tpu.vector_store %arg7[%c0_17, %c0_18, %c0_19, %c0_20], %17 {strides = array<i32>} : memref<1x4x16x16xf32, #tpu.memory_space<vmem>>, vector<1x1x16x16xf32>,
    %18 = vector.extract_strided_slice %9 {offsets = [0, 0], sizes = [16, 16], strides = [1, 1]} : vector<16x64xf32> to vector<16x16xf32>
    %c0_21 = arith.constant 0 : index
    %c0_22 = arith.constant 0 : index
    %c0_23 = arith.constant 0 : index
    %c0_24 = arith.constant 0 : index
    %19 = vector.load %arg8[%c0_21, %c0_22, %c0_23, %c0_24] : memref<1x4x16x16xf32, #tpu.memory_space<vmem>>, vector<1x1x16x16xf32>
    %20 = vector.shape_cast %19 : vector<1x1x16x16xf32> to vector<16x16xf32>
    %21 = vector.shape_cast %18 : vector<16x16xf32> to vector<1x1x16x16xf32>
    tpu.vector_store %arg8[%c0_21, %c0_22, %c0_23, %c0_24], %21 {strides = array<i32>} : memref<1x4x16x16xf32, #tpu.memory_space<vmem>>, vector<1x1x16x16xf32>,
    %22 = vector.extract_strided_slice %5 {offsets = [0, 16], sizes = [8, 16], strides = [1, 1]} : vector<8x64xf32> to vector<8x16xf32>
    %c0_25 = arith.constant 0 : index
    %c1 = arith.constant 1 : index
    %c0_26 = arith.constant 0 : index
    %c0_27 = arith.constant 0 : index
    %23 = vector.load %arg6[%c0_25, %c1, %c0_26, %c0_27] : memref<1x4x8x16xf32, #tpu.memory_space<vmem>>, vector<1x1x8x16xf32>
    %24 = vector.shape_cast %23 : vector<1x1x8x16xf32> to vector<8x16xf32>
    %25 = vector.shape_cast %22 : vector<8x16xf32> to vector<1x1x8x16xf32>
    tpu.vector_store %arg6[%c0_25, %c1, %c0_26, %c0_27], %25 {strides = array<i32>} : memref<1x4x8x16xf32, #tpu.memory_space<vmem>>, vector<1x1x8x16xf32>,
    %26 = vector.extract_strided_slice %7 {offsets = [0, 16], sizes = [16, 16], strides = [1, 1]} : vector<16x64xf32> to vector<16x16xf32>
    %c0_28 = arith.constant 0 : index
    %c1_29 = arith.constant 1 : index
    %c0_30 = arith.constant 0 : index
    %c0_31 = arith.constant 0 : index
    %27 = vector.load %arg7[%c0_28, %c1_29, %c0_30, %c0_31] : memref<1x4x16x16xf32, #tpu.memory_space<vmem>>, vector<1x1x16x16xf32>
    %28 = vector.shape_cast %27 : vector<1x1x16x16xf32> to vector<16x16xf32>
    %29 = vector.shape_cast %26 : vector<16x16xf32> to vector<1x1x16x16xf32>
    tpu.vector_store %arg7[%c0_28, %c1_29, %c0_30, %c0_31], %29 {strides = array<i32>} : memref<1x4x16x16xf32, #tpu.memory_space<vmem>>, vector<1x1x16x16xf32>,
    %30 = vector.extract_strided_slice %9 {offsets = [0, 16], sizes = [16, 16], strides = [1, 1]} : vector<16x64xf32> to vector<16x16xf32>
    %c0_32 = arith.constant 0 : index
    %c1_33 = arith.constant 1 : index
    %c0_34 = arith.constant 0 : index
    %c0_35 = arith.constant 0 : index
    %31 = vector.load %arg8[%c0_32, %c1_33, %c0_34, %c0_35] : memref<1x4x16x16xf32, #tpu.memory_space<vmem>>, vector<1x1x16x16xf32>
    %32 = vector.shape_cast %31 : vector<1x1x16x16xf32> to vector<16x16xf32>
    %33 = vector.shape_cast %30 : vector<16x16xf32> to vector<1x1x16x16xf32>
    tpu.vector_store %arg8[%c0_32, %c1_33, %c0_34, %c0_35], %33 {strides = array<i32>} : memref<1x4x16x16xf32, #tpu.memory_space<vmem>>, vector<1x1x16x16xf32>,
    %34 = vector.extract_strided_slice %5 {offsets = [0, 32], sizes = [8, 16], strides = [1, 1]} : vector<8x64xf32> to vector<8x16xf32>
    %c0_36 = arith.constant 0 : index
    %c2 = arith.constant 2 : index
    %c0_37 = arith.constant 0 : index
    %c0_38 = arith.constant 0 : index
    %35 = vector.load %arg6[%c0_36, %c2, %c0_37, %c0_38] : memref<1x4x8x16xf32, #tpu.memory_space<vmem>>, vector<1x1x8x16xf32>
    %36 = vector.shape_cast %35 : vector<1x1x8x16xf32> to vector<8x16xf32>
    %37 = vector.shape_cast %34 : vector<8x16xf32> to vector<1x1x8x16xf32>
    tpu.vector_store %arg6[%c0_36, %c2, %c0_37, %c0_38], %37 {strides = array<i32>} : memref<1x4x8x16xf32, #tpu.memory_space<vmem>>, vector<1x1x8x16xf32>,
    %38 = vector.extract_strided_slice %7 {offsets = [0, 32], sizes = [16, 16], strides = [1, 1]} : vector<16x64xf32> to vector<16x16xf32>
    %c0_39 = arith.constant 0 : index
    %c2_40 = arith.constant 2 : index
    %c0_41 = arith.constant 0 : index
    %c0_42 = arith.constant 0 : index
    %39 = vector.load %arg7[%c0_39, %c2_40, %c0_41, %c0_42] : memref<1x4x16x16xf32, #tpu.memory_space<vmem>>, vector<1x1x16x16xf32>
    %40 = vector.shape_cast %39 : vector<1x1x16x16xf32> to vector<16x16xf32>
    %41 = vector.shape_cast %38 : vector<16x16xf32> to vector<1x1x16x16xf32>
    tpu.vector_store %arg7[%c0_39, %c2_40, %c0_41, %c0_42], %41 {strides = array<i32>} : memref<1x4x16x16xf32, #tpu.memory_space<vmem>>, vector<1x1x16x16xf32>,
    %42 = vector.extract_strided_slice %9 {offsets = [0, 32], sizes = [16, 16], strides = [1, 1]} : vector<16x64xf32> to vector<16x16xf32>
    %c0_43 = arith.constant 0 : index
    %c2_44 = arith.constant 2 : index
    %c0_45 = arith.constant 0 : index
    %c0_46 = arith.constant 0 : index
    %43 = vector.load %arg8[%c0_43, %c2_44, %c0_45, %c0_46] : memref<1x4x16x16xf32, #tpu.memory_space<vmem>>, vector<1x1x16x16xf32>
    %44 = vector.shape_cast %43 : vector<1x1x16x16xf32> to vector<16x16xf32>
    %45 = vector.shape_cast %42 : vector<16x16xf32> to vector<1x1x16x16xf32>
    tpu.vector_store %arg8[%c0_43, %c2_44, %c0_45, %c0_46], %45 {strides = array<i32>} : memref<1x4x16x16xf32, #tpu.memory_space<vmem>>, vector<1x1x16x16xf32>,
    %46 = vector.extract_strided_slice %5 {offsets = [0, 48], sizes = [8, 16], strides = [1, 1]} : vector<8x64xf32> to vector<8x16xf32>
    %c0_47 = arith.constant 0 : index
    %c3 = arith.constant 3 : index
    %c0_48 = arith.constant 0 : index
    %c0_49 = arith.constant 0 : index
    %47 = vector.load %arg6[%c0_47, %c3, %c0_48, %c0_49] : memref<1x4x8x16xf32, #tpu.memory_space<vmem>>, vector<1x1x8x16xf32>
    %48 = vector.shape_cast %47 : vector<1x1x8x16xf32> to vector<8x16xf32>
    %49 = vector.shape_cast %46 : vector<8x16xf32> to vector<1x1x8x16xf32>
    tpu.vector_store %arg6[%c0_47, %c3, %c0_48, %c0_49], %49 {strides = array<i32>} : memref<1x4x8x16xf32, #tpu.memory_space<vmem>>, vector<1x1x8x16xf32>,
    %50 = vector.extract_strided_slice %7 {offsets = [0, 48], sizes = [16, 16], strides = [1, 1]} : vector<16x64xf32> to vector<16x16xf32>
    %c0_50 = arith.constant 0 : index
    %c3_51 = arith.constant 3 : index
    %c0_52 = arith.constant 0 : index
    %c0_53 = arith.constant 0 : index
    %51 = vector.load %arg7[%c0_50, %c3_51, %c0_52, %c0_53] : memref<1x4x16x16xf32, #tpu.memory_space<vmem>>, vector<1x1x16x16xf32>
    %52 = vector.shape_cast %51 : vector<1x1x16x16xf32> to vector<16x16xf32>
    %53 = vector.shape_cast %50 : vector<16x16xf32> to vector<1x1x16x16xf32>
    tpu.vector_store %arg7[%c0_50, %c3_51, %c0_52, %c0_53], %53 {strides = array<i32>} : memref<1x4x16x16xf32, #tpu.memory_space<vmem>>, vector<1x1x16x16xf32>,
    %54 = vector.extract_strided_slice %9 {offsets = [0, 48], sizes = [16, 16], strides = [1, 1]} : vector<16x64xf32> to vector<16x16xf32>
    %c0_54 = arith.constant 0 : index
    %c3_55 = arith.constant 3 : index
    %c0_56 = arith.constant 0 : index
    %c0_57 = arith.constant 0 : index
    %55 = vector.load %arg8[%c0_54, %c3_55, %c0_56, %c0_57] : memref<1x4x16x16xf32, #tpu.memory_space<vmem>>, vector<1x1x16x16xf32>
    %56 = vector.shape_cast %55 : vector<1x1x16x16xf32> to vector<16x16xf32>
    %57 = vector.shape_cast %54 : vector<16x16xf32> to vector<1x1x16x16xf32>
    tpu.vector_store %arg8[%c0_54, %c3_55, %c0_56, %c0_57], %57 {strides = array<i32>} : memref<1x4x16x16xf32, #tpu.memory_space<vmem>>, vector<1x1x16x16xf32>,
    return
  }
  func.func @transform_0(%arg0: i32) -> (i32, i32, i32) {
    %c0_i32 = arith.constant 0 : i32
    %c0_i32_0 = arith.constant 0 : i32
    %c0_i32_1 = arith.constant 0 : i32
    return %arg0, %c0_i32, %c0_i32_0 : i32, i32, i32
  }
  func.func @transform_1(%arg0: i32) -> (i32, i32, i32) {
    %c0_i32 = arith.constant 0 : i32
    %c0_i32_0 = arith.constant 0 : i32
    %c0_i32_1 = arith.constant 0 : i32
    return %arg0, %c0_i32, %c0_i32_0 : i32, i32, i32
  }
  func.func @transform_2(%arg0: i32) -> (i32, i32) {
    %c0_i32 = arith.constant 0 : i32
    %c0_i32_0 = arith.constant 0 : i32
    %c0_i32_1 = arith.constant 0 : i32
    return %c0_i32, %c0_i32_0 : i32, i32
  }
  func.func @transform_3(%arg0: i32) -> (i32, i32) {
    %c0_i32 = arith.constant 0 : i32
    %c0_i32_0 = arith.constant 0 : i32
    %c0_i32_1 = arith.constant 0 : i32
    return %c0_i32, %c0_i32_0 : i32, i32
  }
  func.func @transform_4(%arg0: i32) -> (i32, i32) {
    %c0_i32 = arith.constant 0 : i32
    %c0_i32_0 = arith.constant 0 : i32
    %c0_i32_1 = arith.constant 0 : i32
    return %c0_i32, %c0_i32_0 : i32, i32
  }
  func.func @transform_5(%arg0: i32) -> (i32, i32, i32, i32) {
    %c0_i32 = arith.constant 0 : i32
    %c0_i32_0 = arith.constant 0 : i32
    %c0_i32_1 = arith.constant 0 : i32
    %c0_i32_2 = arith.constant 0 : i32
    return %arg0, %c0_i32, %c0_i32_0, %c0_i32_1 : i32, i32, i32, i32
  }
  func.func @transform_6(%arg0: i32) -> (i32, i32, i32, i32) {
    %c0_i32 = arith.constant 0 : i32
    %c0_i32_0 = arith.constant 0 : i32
    %c0_i32_1 = arith.constant 0 : i32
    %c0_i32_2 = arith.constant 0 : i32
    return %arg0, %c0_i32, %c0_i32_0, %c0_i32_1 : i32, i32, i32, i32
  }
  func.func @transform_7(%arg0: i32) -> (i32, i32, i32, i32) {
    %c0_i32 = arith.constant 0 : i32
    %c0_i32_0 = arith.constant 0 : i32
    %c0_i32_1 = arith.constant 0 : i32
    %c0_i32_2 = arith.constant 0 : i32
    return %arg0, %c0_i32, %c0_i32_0, %c0_i32_1 : i32, i32, i32, i32
  }
}

</mosaic_0001>

<llo_original>
// kernel: tpu_custom_call.1
$region0: #{tpu_custom_call.1}
  #allocation0 [shape = 'u32[]', space=smem, size = 0x4, offset = 0x4, fixed_abs, tag = 'smem constant byte address 0x4 - core index']
  #allocation1 [shape = 'u32[144,128]{1,0:T(1,128)}', space=vmem, size = 0x12000, scoped, tag = 'internal scratch']
  %s0 = inlined_call_operand.hbm [shape: f32[2,16,32], index: 0, kind: input, shape index: {}]
  %s1 = inlined_call_operand.hbm [shape: f32[2,8,32], index: 1, kind: input, shape index: {}]
  %s2 = inlined_call_operand.hbm [shape: f32[32,64], index: 2, kind: input, shape index: {}]
  %s3 = inlined_call_operand.hbm [shape: f32[32,64], index: 3, kind: input, shape index: {}]
  %s4 = inlined_call_operand.hbm [shape: f32[32,64], index: 4, kind: input, shape index: {}]
  %s5 = inlined_call_operand.hbm [shape: f32[2,4,8,16], index: 5, kind: output, shape index: {0}]
  %s6 = inlined_call_operand.hbm [shape: f32[2,4,16,16], index: 6, kind: output, shape index: {1}]
  %s7 = inlined_call_operand.hbm [shape: f32[2,4,16,16], index: 7, kind: output, shape index: {2}]
  %8 = xla_tuple %s5, %s6, %s7
  %s9 = sld [smem:[#allocation0]]
  $region89: #{tpu_custom_call.1} parent=0
    _
  %s11 = ssub.s32 1, %s9
  %s12 = scalar_select 0, %s11, %s9
  $region1: #{tpu_custom_call.1} parent=0
    #allocation2 [shape = 'u8[16384]{0}', space=vmem, size = 0x4000, scoped, tag = 'input window, operand 0']
    #allocation3 [shape = 's32[2]{0}', space=sflag, size = 0x8, scoped, tag = 'scoped memory for tpu_custom_call.1']
    #allocation4 [shape = 's32[2]{0}', space=sflag, size = 0x8, scoped, tag = 'scoped memory for tpu_custom_call.1']
    #allocation5 [shape = 'u8[8192]{0}', space=vmem, size = 0x2000, scoped, tag = 'input window, operand 1']
    #allocation6 [shape = 's32[2]{0}', space=sflag, size = 0x8, scoped, tag = 'scoped memory for tpu_custom_call.1']
    #allocation7 [shape = 'u8[16384]{0}', space=vmem, size = 0x4000, scoped, tag = 'input window, operand 2, single buffered']
    #allocation8 [shape = 'u8[16384]{0}', space=vmem, size = 0x4000, scoped, tag = 'input window, operand 3, single buffered']
    #allocation9 [shape = 's32[1]{0}', space=sflag, size = 0x4, scoped, tag = 'scoped memory for tpu_custom_call.1']
    #allocation10 [shape = 'u8[16384]{0}', space=vmem, size = 0x4000, scoped, tag = 'input window, operand 4, single buffered']
    #allocation11 [shape = 'u8[32768]{0}', space=vmem, size = 0x8000, scoped, tag = 'output window, operand 0']
    #allocation12 [shape = 'u8[65536]{0}', space=vmem, size = 0x10000, scoped, tag = 'output window, operand 1']
    #allocation13 [shape = 's32[2]{0}', space=sflag, size = 0x8, scoped, tag = 'scoped memory for tpu_custom_call.1']
    #allocation14 [shape = 'u8[65536]{0}', space=vmem, size = 0x10000, scoped, tag = 'output window, operand 2']
    %13 = vsyncpa [#allocation3], 0
    %s14 = scalar_lea.sflag [#allocation3], 1
    %15 = vsyncpa %s14, 0
    %16 = vsyncpa [#allocation6], 0
    %s17 = scalar_lea.sflag [#allocation6], 1
    %18 = vsyncpa %s17, 0
    %19 = vsyncpa [#allocation9], 0
    %20 = vsyncpa [#allocation4], 0
    %s21 = scalar_lea.sflag [#allocation4], 1
    %22 = vsyncpa %s21, 0
    %23 = vsyncpa [#allocation13], 0
    %s24 = scalar_lea.sflag [#allocation13], 1
    %25 = vsyncpa %s24, 0
    loop: start=0, step=1, limit=4
    $region2: #{tpu_custom_call.1} parent=1 // loop_pre_header
      _
    $region3: #{tpu_custom_call.1} parent=1 // loop_header
      %s27 = sphi 0, %s31
      %p28 = scmp.ge.s32.totalorder %s27, 4
      %s37 = sphi 0, %s39
      %s40 = sphi 0, %s37
      %s41 = sphi 0, %s40
      %s57 = sphi 0, %s41
      %s63 = sphi 0, %s65
      %s66 = sphi 0, %s63
      %s67 = sphi 0, %s66
      %s83 = sphi 0, %s67
      %s87 = sphi 0, %s87
      %s89 = sphi 0, %s87
      %s90 = sphi 0, %s89
      %s104 = sphi 0, %s90
      %s108 = sphi 0, %s108
      %s110 = sphi 0, %s108
      %s111 = sphi 0, %s110
      %s125 = sphi 0, %s111
      %s129 = sphi 0, %s129
      %s131 = sphi 0, %s129
      %s132 = sphi 0, %s131
      %s146 = sphi 0, %s132
      %s152 = sphi 0, %s154
      %s155 = sphi 0, %s152
      %s156 = sphi 0, %s155
      %s172 = sphi 0, %s156
      %s178 = sphi 0, %s180
      %s181 = sphi 0, %s178
      %s182 = sphi 0, %s181
      %s198 = sphi 0, %s182
      %s204 = sphi 0, %s206
      %s207 = sphi 0, %s204
      %s208 = sphi 0, %s207
      %s224 = sphi 0, %s208
    $region4: #{tpu_custom_call.1} parent=1 // loop_header_branch
      %30 = sbr.rel (%p28) target = $region8
    $region5: #{tpu_custom_call.1} parent=1 // loop_body
      %s32 = ssub.s32 %s27, 1
      %s33 = ssub.s32 %s27, 2
      %s34 = sadd.s32 %s27, 1
      %s35 = ssub.s32 %s27, %s34
      %p36 = scmp.eq.s32.totalorder %s35, 0
      %s38 = sadd.s32 %s37, 1
      %s39 = scalar_select %p36, %s37, %s38
      %p42 = pneg %p36
      %p43 = scmp.eq.s32.totalorder %s27, 1
      %p44 = por %p42, %p43
      %p45 = scmp.ne.s32.totalorder %s37, %s40
      %p46 = scmp.eq.s32.totalorder %s27, 0
      %p47 = por %p45, %p46
      %p48 = scmp.ne.s32.totalorder %s37, %s40
      %p49 = scmp.eq.s32.totalorder %s32, 1
      %p50 = por %p48, %p49
      %p51 = scmp.ne.s32.totalorder %s40, %s41
      %p52 = scmp.eq.s32.totalorder %s32, 0
      %p53 = por %p51, %p52
      %p54 = scmp.ne.s32.totalorder %s40, %s41
      %p55 = scmp.eq.s32.totalorder %s33, 1
      %p56 = por %p54, %p55
      %p58 = scmp.ne.s32.totalorder %s41, %s57
      %p59 = scmp.eq.s32.totalorder %s33, 0
      %p60 = por %p58, %p59
      %s61 = ssub.s32 %s27, %s34
      %p62 = scmp.eq.s32.totalorder %s61, 0
      %s64 = sadd.s32 %s63, 1
      %s65 = scalar_select %p62, %s63, %s64
      %p68 = pneg %p62
      %p69 = scmp.eq.s32.totalorder %s27, 1
      %p70 = por %p68, %p69
      %p71 = scmp.ne.s32.totalorder %s63, %s66
      %p72 = scmp.eq.s32.totalorder %s27, 0
      %p73 = por %p71, %p72
      %p74 = scmp.ne.s32.totalorder %s63, %s66
      %p75 = scmp.eq.s32.totalorder %s32, 1
      %p76 = por %p74, %p75
      %p77 = scmp.ne.s32.totalorder %s66, %s67
      %p78 = scmp.eq.s32.totalorder %s32, 0
      %p79 = por %p77, %p78
      %p80 = scmp.ne.s32.totalorder %s66, %s67
      %p81 = scmp.eq.s32.totalorder %s33, 1
      %p82 = por %p80, %p81
      %p84 = scmp.ne.s32.totalorder %s67, %s83
      %p85 = scmp.eq.s32.totalorder %s33, 0
      %p86 = por %p84, %p85
      %s88 = sadd.s32 %s87, 1
      %p91 = scmp.eq.s32.totalorder %s27, 1
      %p92 = scmp.ne.s32.totalorder %s87, %s89
      %p93 = scmp.eq.s32.totalorder %s27, 0
      %p94 = por %p92, %p93
      %p95 = scmp.ne.s32.totalorder %s87, %s89
      %p96 = scmp.eq.s32.totalorder %s32, 1
      %p97 = por %p95, %p96
      %p98 = scmp.ne.s32.totalorder %s89, %s90
      %p99 = scmp.eq.s32.totalorder %s32, 0
      %p100 = por %p98, %p99
      %p101 = scmp.ne.s32.totalorder %s89, %s90
      %p102 = scmp.eq.s32.totalorder %s33, 1
      %p103 = por %p101, %p102
      %p105 = scmp.ne.s32.totalorder %s90, %s104
      %p106 = scmp.eq.s32.totalorder %s33, 0
      %p107 = por %p105, %p106
      %s109 = sadd.s32 %s108, 1
      %p112 = scmp.eq.s32.totalorder %s27, 1
      %p113 = scmp.ne.s32.totalorder %s108, %s110
      %p114 = scmp.eq.s32.totalorder %s27, 0
      %p115 = por %p113, %p114
      %p116 = scmp.ne.s32.totalorder %s108, %s110
      %p117 = scmp.eq.s32.totalorder %s32, 1
      %p118 = por %p116, %p117
      %p119 = scmp.ne.s32.totalorder %s110, %s111
      %p120 = scmp.eq.s32.totalorder %s32, 0
      %p121 = por %p119, %p120
      %p122 = scmp.ne.s32.totalorder %s110, %s111
      %p123 = scmp.eq.s32.totalorder %s33, 1
      %p124 = por %p122, %p123
      %p126 = scmp.ne.s32.totalorder %s111, %s125
      %p127 = scmp.eq.s32.totalorder %s33, 0
      %p128 = por %p126, %p127
      %s130 = sadd.s32 %s129, 1
      %p133 = scmp.eq.s32.totalorder %s27, 1
      %p134 = scmp.ne.s32.totalorder %s129, %s131
      %p135 = scmp.eq.s32.totalorder %s27, 0
      %p136 = por %p134, %p135
      %p137 = scmp.ne.s32.totalorder %s129, %s131
      %p138 = scmp.eq.s32.totalorder %s32, 1
      %p139 = por %p137, %p138
      %p140 = scmp.ne.s32.totalorder %s131, %s132
      %p141 = scmp.eq.s32.totalorder %s32, 0
      %p142 = por %p140, %p141
      %p143 = scmp.ne.s32.totalorder %s131, %s132
      %p144 = scmp.eq.s32.totalorder %s33, 1
      %p145 = por %p143, %p144
      %p147 = scmp.ne.s32.totalorder %s132, %s146
      %p148 = scmp.eq.s32.totalorder %s33, 0
      %p149 = por %p147, %p148
      %s150 = ssub.s32 %s27, %s34
      %p151 = scmp.eq.s32.totalorder %s150, 0
      %s153 = sadd.s32 %s152, 1
      %s154 = scalar_select %p151, %s152, %s153
      %p157 = pneg %p151
      %p158 = scmp.eq.s32.totalorder %s27, 1
      %p159 = por %p157, %p158
      %p160 = scmp.ne.s32.totalorder %s152, %s155
      %p161 = scmp.eq.s32.totalorder %s27, 0
      %p162 = por %p160, %p161
      %p163 = scmp.ne.s32.totalorder %s152, %s155
      %p164 = scmp.eq.s32.totalorder %s32, 1
      %p165 = por %p163, %p164
      %p166 = scmp.ne.s32.totalorder %s155, %s156
      %p167 = scmp.eq.s32.totalorder %s32, 0
      %p168 = por %p166, %p167
      %p169 = scmp.ne.s32.totalorder %s155, %s156
      %p170 = scmp.eq.s32.totalorder %s33, 1
      %p171 = por %p169, %p170
      %p173 = scmp.ne.s32.totalorder %s156, %s172
      %p174 = scmp.eq.s32.totalorder %s33, 0
      %p175 = por %p173, %p174
      %s176 = ssub.s32 %s27, %s34
      %p177 = scmp.eq.s32.totalorder %s176, 0
      %s179 = sadd.s32 %s178, 1
      %s180 = scalar_select %p177, %s178, %s179
      %p183 = pneg %p177
      %p184 = scmp.eq.s32.totalorder %s27, 1
      %p185 = por %p183, %p184
      %p186 = scmp.ne.s32.totalorder %s178, %s181
      %p187 = scmp.eq.s32.totalorder %s27, 0
      %p188 = por %p186, %p187
      %p189 = scmp.ne.s32.totalorder %s178, %s181
      %p190 = scmp.eq.s32.totalorder %s32, 1
      %p191 = por %p189, %p190
      %p192 = scmp.ne.s32.totalorder %s181, %s182
      %p193 = scmp.eq.s32.totalorder %s32, 0
      %p194 = por %p192, %p193
      %p195 = scmp.ne.s32.totalorder %s181, %s182
      %p196 = scmp.eq.s32.totalorder %s33, 1
      %p197 = por %p195, %p196
      %p199 = scmp.ne.s32.totalorder %s182, %s198
      %p200 = scmp.eq.s32.totalorder %s33, 0
      %p201 = por %p199, %p200
      %s202 = ssub.s32 %s27, %s34
      %p203 = scmp.eq.s32.totalorder %s202, 0
      %s205 = sadd.s32 %s204, 1
      %s206 = scalar_select %p203, %s204, %s205
      %p209 = pneg %p203
      %p210 = scmp.eq.s32.totalorder %s27, 1
      %p211 = por %p209, %p210
      %p212 = scmp.ne.s32.totalorder %s204, %s207
      %p213 = scmp.eq.s32.totalorder %s27, 0
      %p214 = por %p212, %p213
      %p215 = scmp.ne.s32.totalorder %s204, %s207
      %p216 = scmp.eq.s32.totalorder %s32, 1
      %p217 = por %p215, %p216
      %p218 = scmp.ne.s32.totalorder %s207, %s208
      %p219 = scmp.eq.s32.totalorder %s32, 0
      %p220 = por %p218, %p219
      %p221 = scmp.ne.s32.totalorder %s207, %s208
      %p222 = scmp.eq.s32.totalorder %s33, 1
      %p223 = por %p221, %p222
      %p225 = scmp.ne.s32.totalorder %s208, %s224
      %p226 = scmp.eq.s32.totalorder %s33, 0
      %p227 = por %p225, %p226
      %p228 = scmp.le.s32.totalorder 1, %s27
      %p229 = scmp.lt.s32.totalorder %s27, 3
      %p230 = pnand %p228, %p229
      %p231 = pneg %p230
      // Predicated region
      $region9: #{tpu_custom_call.1} parent=5 // pred_check
        _
      $region10: #{tpu_custom_call.1} parent=5 // pred_check_branch
        %233 = sbr.rel (%p230) target = $region12
      $region11: #{tpu_custom_call.1} parent=5 // pred_region
        %s234 = ssub.s32 %s27, 1
        // Predicated region
        $region13: #{tpu_custom_call.1} parent=11 // pred_check
          %p235 = pneg %p100
        $region14: #{tpu_custom_call.1} parent=11 // pred_check_branch
          %237 = sbr.rel (%p235) target = $region16
        $region15: #{tpu_custom_call.1} parent=11 // pred_region
          %s239 = ssub.s32 512, 512
          %240 = vsyncadd [#allocation6], %s239
          %s241 = sshll.u32 [#allocation7], 4
          %s242 = int_to_ptr.vmem [resolvable:$true] %s241
          %247 = dma.hbm_to_vmem [thread:$0]  %s2, 512, %s242, [#allocation6], 128, 128, 8
        $region16: #{tpu_custom_call.1} parent=11 // pred_fallthru
          _
        // Predicated region
        $region17: #{tpu_custom_call.1} parent=11 // pred_check
          %p248 = pneg %p121
        $region18: #{tpu_custom_call.1} parent=11 // pred_check_branch
          %250 = sbr.rel (%p248) target = $region20
        $region19: #{tpu_custom_call.1} parent=11 // pred_region
          %s252 = ssub.s32 512, 512
          %253 = vsyncadd [#allocation9], %s252
          %s254 = sshll.u32 [#allocation8], 4
          %s255 = int_to_ptr.vmem [resolvable:$true] %s254
          %260 = dma.hbm_to_vmem [thread:$0]  %s3, 512, %s255, [#allocation9], 128, 128, 8
        $region20: #{tpu_custom_call.1} parent=11 // pred_fallthru
          _
        // Predicated region
        $region21: #{tpu_custom_call.1} parent=11 // pred_check
          %p261 = pneg %p142
        $region22: #{tpu_custom_call.1} parent=11 // pred_check_branch
          %263 = sbr.rel (%p261) target = $region24
        $region23: #{tpu_custom_call.1} parent=11 // pred_region
          %s265 = ssub.s32 512, 512
          %266 = vsyncadd [#allocation9], %s265
          %s267 = sshll.u32 [#allocation10], 4
          %s268 = int_to_ptr.vmem [resolvable:$true] %s267
          %273 = dma.hbm_to_vmem [thread:$0]  %s4, 512, %s268, [#allocation9], 128, 128, 8
        $region24: #{tpu_custom_call.1} parent=11 // pred_fallthru
          _
      $region12: #{tpu_custom_call.1} parent=5 // pred_fallthru
        _
      %p274 = scmp.lt.s32.totalorder %s27, 2
      // Predicated region
      $region25: #{tpu_custom_call.1} parent=5 // pred_check
        %p275 = pneg %p274
      $region26: #{tpu_custom_call.1} parent=5 // pred_check_branch
        %277 = sbr.rel (%p275) target = $region28
      $region27: #{tpu_custom_call.1} parent=5 // pred_region
        // Predicated region
        $region29: #{tpu_custom_call.1} parent=27 // pred_check
          %p278 = pneg %p47
        $region30: #{tpu_custom_call.1} parent=27 // pred_check_branch
          %280 = sbr.rel (%p278) target = $region32
        $region31: #{tpu_custom_call.1} parent=27 // pred_region
          %s281 = sand.u32 %s37, 1
          %s282 = scalar_lea.sflag [#allocation3], %s281
          %s283 = sand.u32 %s37, 1
          %s284 = smul.addr %s283, 16
          %s285 = scalar_lea.vmem [#allocation2], %s284
          %s287 = ssub.s32 256, 256
          %288 = vsyncadd %s282, %s287
          %s289 = smul.addr %s27, 2
          %s290 = smul.addr %s289, 128
          %s291 = scalar_lea.hbm %s0, %s290
          %s292 = sshll.u32 %s285, 4
          %s293 = int_to_ptr.vmem [resolvable:$true] %s292
          %298 = dma.hbm_to_vmem [thread:$0]  %s291, 256, %s293, %s282, 128, 128, 8
        $region32: #{tpu_custom_call.1} parent=27 // pred_fallthru
          _
        // Predicated region
        $region33: #{tpu_custom_call.1} parent=27 // pred_check
          %p299 = pneg %p73
        $region34: #{tpu_custom_call.1} parent=27 // pred_check_branch
          %301 = sbr.rel (%p299) target = $region36
        $region35: #{tpu_custom_call.1} parent=27 // pred_region
          %s302 = sand.u32 %s27, 1
          %s303 = scalar_lea.sflag [#allocation6], %s302
          %s304 = sand.u32 %s63, 1
          %s305 = smul.addr %s304, 8
          %s306 = scalar_lea.vmem [#allocation5], %s305
          %s308 = ssub.s32 128, 128
          %309 = vsyncadd %s303, %s308
          %s310 = smul.addr %s27, 128
          %s311 = scalar_lea.hbm %s1, %s310
          %s313 = sshll.u32 %s306, 4
          %s314 = int_to_ptr.vmem [resolvable:$true] %s313
          %316 = dma.hbm_to_vmem [thread:$0]  %s311, 128, %s314, %s303
        $region36: #{tpu_custom_call.1} parent=27 // pred_fallthru
          _
      $region28: #{tpu_custom_call.1} parent=5 // pred_fallthru
        _
      %p317 = scmp.le.s32.totalorder 1, %s27
      %p318 = scmp.lt.s32.totalorder %s27, 3
      %p319 = pnand %p317, %p318
      %p320 = pneg %p319
      // Predicated region
      $region37: #{tpu_custom_call.1} parent=5 // pred_check
        _
      $region38: #{tpu_custom_call.1} parent=5 // pred_check_branch
        %322 = sbr.rel (%p319) target = $region40
      $region39: #{tpu_custom_call.1} parent=5 // pred_region
        %s323 = ssub.s32 %s27, 1
        %s324 = sand.u32 %s40, 1
        %s325 = scalar_lea.sflag [#allocation3], %s324
        %s326 = sand.u32 %s40, 1
        %s327 = smul.addr %s326, 16
        %s328 = scalar_lea.vmem [#allocation2], %s327
        // Predicated region
        $region41: #{tpu_custom_call.1} parent=39 // pred_check
          %p329 = pneg %p53
        $region42: #{tpu_custom_call.1} parent=39 // pred_check_branch
          %331 = sbr.rel (%p329) target = $region44
        $region43: #{tpu_custom_call.1} parent=39 // pred_region
          %332 = dma.done %s325, 256
        $region44: #{tpu_custom_call.1} parent=39 // pred_fallthru
          _
        %s333 = sand.u32 %s32, 1
        %s334 = scalar_lea.sflag [#allocation6], %s333
        %s335 = sand.u32 %s66, 1
        %s336 = smul.addr %s335, 8
        %s337 = scalar_lea.vmem [#allocation5], %s336
        // Predicated region
        $region45: #{tpu_custom_call.1} parent=39 // pred_check
          %p338 = pneg %p79
        $region46: #{tpu_custom_call.1} parent=39 // pred_check_branch
          %340 = sbr.rel (%p338) target = $region48
        $region47: #{tpu_custom_call.1} parent=39 // pred_region
          %341 = dma.done %s334, 128
        $region48: #{tpu_custom_call.1} parent=39 // pred_fallthru
          _
        // Predicated region
        $region49: #{tpu_custom_call.1} parent=39 // pred_check
          %p342 = pneg %p100
        $region50: #{tpu_custom_call.1} parent=39 // pred_check_branch
          %344 = sbr.rel (%p342) target = $region52
        $region51: #{tpu_custom_call.1} parent=39 // pred_region
          %345 = dma.done [#allocation6], 512
        $region52: #{tpu_custom_call.1} parent=39 // pred_fallthru
          _
        // Predicated region
        $region53: #{tpu_custom_call.1} parent=39 // pred_check
          %p346 = pneg %p121
        $region54: #{tpu_custom_call.1} parent=39 // pred_check_branch
          %348 = sbr.rel (%p346) target = $region56
        $region55: #{tpu_custom_call.1} parent=39 // pred_region
          %349 = dma.done [#allocation9], 512
        $region56: #{tpu_custom_call.1} parent=39 // pred_fallthru
          _
        // Predicated region
        $region57: #{tpu_custom_call.1} parent=39 // pred_check
          %p350 = pneg %p142
        $region58: #{tpu_custom_call.1} parent=39 // pred_check_branch
          %352 = sbr.rel (%p350) target = $region60
        $region59: #{tpu_custom_call.1} parent=39 // pred_region
          %353 = dma.done [#allocation9], 512
        $region60: #{tpu_custom_call.1} parent=39 // pred_fallthru
          _
        %s354 = sand.u32 %s40, 1
        %s355 = scalar_lea.sflag [#allocation3], %s354
        %s356 = sand.u32 %s40, 1
        %s357 = smul.addr %s356, 16
        %s358 = scalar_lea.vmem [#allocation2], %s357
        %p359 = pneg %p53
        %p360 = pneg %p50
        %s361 = sand.u32 %s32, 1
        %s362 = scalar_lea.sflag [#allocation6], %s361
        %s363 = sand.u32 %s66, 1
        %s364 = smul.addr %s363, 8
        %s365 = scalar_lea.vmem [#allocation5], %s364
        %p366 = pneg %p79
        %p367 = pneg %p76
        %p368 = pneg %p100
        %p369 = pneg %p97
        %p370 = pneg %p121
        %p371 = pneg %p118
        %p372 = pneg %p142
        %p373 = pneg %p139
        %p374 = pneg %p168
        %p375 = pneg %p165
        %s376 = sand.u32 %s155, 1
        %s377 = scalar_lea.sflag [#allocation4], %s376
        %s378 = sand.u32 %s155, 1
        %s379 = smul.addr %s378, 32
        %s380 = scalar_lea.vmem [#allocation11], %s379
        %p381 = pneg %p194
        %p382 = pneg %p191
        %s383 = sand.u32 %s32, 1
        %s384 = scalar_lea.sflag [#allocation13], %s383
        %s385 = sand.u32 %s181, 1
        %s386 = smul.addr %s385, 64
        %s387 = scalar_lea.vmem [#allocation12], %s386
        %p388 = pneg %p220
        %p389 = pneg %p217
        %s390 = sand.u32 %s32, 1
        %s391 = scalar_lea.sflag [#allocation13], %s390
        %s392 = sand.u32 %s207, 1
        %s393 = smul.addr %s392, 64
        %s394 = scalar_lea.vmem [#allocation14], %s393
        %v395 = vld [vmem:[%s328] sm:$0xff]
        %v396 = vld [vmem:[%s328 + $0x8] sm:$0xff]
        %v397 = vld [vmem:[%s337] sm:$0xff]
        %v398 = vld [vmem:[#allocation7] sm:$0xff]
        %v399 = vld [vmem:[#allocation7 + $0x8] sm:$0xff]
        %v400 = vld [vmem:[#allocation7 + $0x10] sm:$0xff]
        %v401 = vld [vmem:[#allocation7 + $0x18] sm:$0xff]
        %vm402 = vcmask 261120
        %v404 = vsel %vm402, %v397, 0
        %406 = vmatprep.subr.mxu0 0.0
        %407 = vmatpush1.msra.mxu0 0.0
        %408 = vmatprep.subr.mxu0 0.0
        %409 = vmatpush1.msra.mxu0 0.0
        %410 = vmatprep.subr.mxu0 0.0
        %411 = vmatpush1.msra.mxu0 0.0
        %412 = vmatprep.subr.mxu0 0.0
        %413 = vmatpush1.msra.mxu0 0.0
        %414 = vmatprep.subr.mxu0 0.0
        %415 = vmatpush1.msra.mxu0 0.0
        %416 = vmatprep.subr.mxu0 0.0
        %417 = vmatpush1.msra.mxu0 0.0
        %418 = vmatprep.subr.mxu0 0.0
        %419 = vmatpush1.msra.mxu0 0.0
        %420 = vmatprep.subr.mxu0 0.0
        %421 = vmatpush1.msra.mxu0 0.0
        %422 = vmatprep.subr.mxu0 0.0
        %423 = vmatpush1.msra.mxu0 0.0
        %424 = vmatprep.subr.mxu0 0.0
        %425 = vmatpush1.msra.mxu0 0.0
        %426 = vmatprep.subr.mxu0 0.0
        %427 = vmatpush1.msra.mxu0 0.0
        %428 = vmatprep.subr.mxu0 0.0
        %429 = vmatpush1.msra.mxu0 0.0
        %430 = vmatprep.subr.mxu0 0.0
        %431 = vmatpush1.msra.mxu0 %v401
        %432 = vmatprep.subr.mxu0 0.0
        %433 = vmatpush1.msra.mxu0 %v400
        %434 = vmatprep.subr.mxu0 0.0
        %435 = vmatpush1.msra.mxu0 %v399
        %436 = vmatprep.subr.mxu0 0.0
        %437 = vmatpush1.msra.mxu0 %v398
        %438 = vmatprep.subr.mxu0 0.0
        %439 = vmatpush2.msra.mxu0 0.0
        %440 = vmatprep.subr.mxu0 0.0
        %441 = vmatpush2.msra.mxu0 0.0
        %442 = vmatprep.subr.mxu0 0.0
        %443 = vmatpush2.msra.mxu0 0.0
        %444 = vmatprep.subr.mxu0 0.0
        %445 = vmatpush2.msra.mxu0 0.0
        %446 = vmatprep.subr.mxu0 0.0
        %447 = vmatpush2.msra.mxu0 0.0
        %448 = vmatprep.subr.mxu0 0.0
        %449 = vmatpush2.msra.mxu0 0.0
        %450 = vmatprep.subr.mxu0 0.0
        %451 = vmatpush2.msra.mxu0 0.0
        %452 = vmatprep.subr.mxu0 0.0
        %453 = vmatpush2.msra.mxu0 0.0
        %454 = vmatprep.subr.mxu0 0.0
        %455 = vmatpush2.msra.mxu0 0.0
        %456 = vmatprep.subr.mxu0 0.0
        %457 = vmatpush2.msra.mxu0 0.0
        %458 = vmatprep.subr.mxu0 0.0
        %459 = vmatpush2.msra.mxu0 0.0
        %460 = vmatprep.subr.mxu0 0.0
        %461 = vmatpush2.msra.mxu0 0.0
        %462 = vmatprep.subr.mxu0 0.0
        %463 = vmatpush2.msra.mxu0 0.0
        %464 = vmatprep.subr.mxu0 0.0
        %465 = vmatpush2.msra.mxu0 0.0
        %466 = vmatprep.subr.mxu0 0.0
        %467 = vmatpush2.msra.mxu0 0.0
        %468 = vmatprep.subr.mxu0 0.0
        %469 = vmatpush2.msra.mxu0 0.0
        %470 = vmatprep.mubr.f32.mxu0 0.0
        %471 = vmatmul.mubr.f32.gmra.mxu0 %v404
        %v472 = vpop.f32.mrf.mxu0
        %v473 = vadd.f32 0.0, %v472
        %v474 = vpop.f32.mrf.mxu0
        %475 = vdwg.mxu0
        %v476 = vld [vmem:[#allocation8] sm:$0xff]
        %v477 = vld [vmem:[#allocation8 + $0x8] sm:$0xff]
        %v478 = vld [vmem:[#allocation8 + $0x10] sm:$0xff]
        %v479 = vld [vmem:[#allocation8 + $0x18] sm:$0xff]
        %v481 = vsel %vm402, %v395, 0
        %v484 = vsel %vm402, %v396, 0
        %486 = vmatprep.subr.mxu0 0.0
        %487 = vmatpush1.msra.mxu0 0.0
        %488 = vmatprep.subr.mxu0 0.0
        %489 = vmatpush1.msra.mxu0 0.0
        %490 = vmatprep.subr.mxu0 0.0
        %491 = vmatpush1.msra.mxu0 0.0
        %492 = vmatprep.subr.mxu0 0.0
        %493 = vmatpush1.msra.mxu0 0.0
        %494 = vmatprep.subr.mxu0 0.0
        %495 = vmatpush1.msra.mxu0 0.0
        %496 = vmatprep.subr.mxu0 0.0
        %497 = vmatpush1.msra.mxu0 0.0
        %498 = vmatprep.subr.mxu0 0.0
        %499 = vmatpush1.msra.mxu0 0.0
        %500 = vmatprep.subr.mxu0 0.0
        %501 = vmatpush1.msra.mxu0 0.0
        %502 = vmatprep.subr.mxu0 0.0
        %503 = vmatpush1.msra.mxu0 0.0
        %504 = vmatprep.subr.mxu0 0.0
        %505 = vmatpush1.msra.mxu0 0.0
        %506 = vmatprep.subr.mxu0 0.0
        %507 = vmatpush1.msra.mxu0 0.0
        %508 = vmatprep.subr.mxu0 0.0
        %509 = vmatpush1.msra.mxu0 0.0
        %510 = vmatprep.subr.mxu0 0.0
        %511 = vmatpush1.msra.mxu0 %v479
        %512 = vmatprep.subr.mxu0 0.0
        %513 = vmatpush1.msra.mxu0 %v478
        %514 = vmatprep.subr.mxu0 0.0
        %515 = vmatpush1.msra.mxu0 %v477
        %516 = vmatprep.subr.mxu0 0.0
        %517 = vmatpush1.msra.mxu0 %v476
        %518 = vmatprep.subr.mxu0 0.0
        %519 = vmatpush2.msra.mxu0 0.0
        %520 = vmatprep.subr.mxu0 0.0
        %521 = vmatpush2.msra.mxu0 0.0
        %522 = vmatprep.subr.mxu0 0.0
        %523 = vmatpush2.msra.mxu0 0.0
        %524 = vmatprep.subr.mxu0 0.0
        %525 = vmatpush2.msra.mxu0 0.0
        %526 = vmatprep.subr.mxu0 0.0
        %527 = vmatpush2.msra.mxu0 0.0
        %528 = vmatprep.subr.mxu0 0.0
        %529 = vmatpush2.msra.mxu0 0.0
        %530 = vmatprep.subr.mxu0 0.0
        %531 = vmatpush2.msra.mxu0 0.0
        %532 = vmatprep.subr.mxu0 0.0
        %533 = vmatpush2.msra.mxu0 0.0
        %534 = vmatprep.subr.mxu0 0.0
        %535 = vmatpush2.msra.mxu0 0.0
        %536 = vmatprep.subr.mxu0 0.0
        %537 = vmatpush2.msra.mxu0 0.0
        %538 = vmatprep.subr.mxu0 0.0
        %539 = vmatpush2.msra.mxu0 0.0
        %540 = vmatprep.subr.mxu0 0.0
        %541 = vmatpush2.msra.mxu0 0.0
        %542 = vmatprep.subr.mxu0 0.0
        %543 = vmatpush2.msra.mxu0 0.0
        %544 = vmatprep.subr.mxu0 0.0
        %545 = vmatpush2.msra.mxu0 0.0
        %546 = vmatprep.subr.mxu0 0.0
        %547 = vmatpush2.msra.mxu0 0.0
        %548 = vmatprep.subr.mxu0 0.0
        %549 = vmatpush2.msra.mxu0 0.0
        %550 = vmatprep.mubr.f32.mxu0 0.0
        %551 = vmatmul.mubr.f32.gmra.mxu0 %v481
        %v552 = vpop.f32.mrf.mxu0
        %v553 = vadd.f32 0.0, %v552
        %v554 = vpop.f32.mrf.mxu0
        %555 = vmatprep.mubr.f32.mxu0 0.0
        %556 = vmatmul.mubr.f32.gmra.mxu0 %v484
        %v557 = vpop.f32.mrf.mxu0
        %v558 = vadd.f32 0.0, %v557
        %v559 = vpop.f32.mrf.mxu0
        %560 = vdwg.mxu0
        %v561 = vld [vmem:[#allocation10] sm:$0xff]
        %v562 = vld [vmem:[#allocation10 + $0x8] sm:$0xff]
        %v563 = vld [vmem:[#allocation10 + $0x10] sm:$0xff]
        %v564 = vld [vmem:[#allocation10 + $0x18] sm:$0xff]
        %565 = vmatprep.subr.mxu0 0.0
        %566 = vmatpush1.msra.mxu0 0.0
        %567 = vmatprep.subr.mxu0 0.0
        %568 = vmatpush1.msra.mxu0 0.0
        %569 = vmatprep.subr.mxu0 0.0
        %570 = vmatpush1.msra.mxu0 0.0
        %571 = vmatprep.subr.mxu0 0.0
        %572 = vmatpush1.msra.mxu0 0.0
        %573 = vmatprep.subr.mxu0 0.0
        %574 = vmatpush1.msra.mxu0 0.0
        %575 = vmatprep.subr.mxu0 0.0
        %576 = vmatpush1.msra.mxu0 0.0
        %577 = vmatprep.subr.mxu0 0.0
        %578 = vmatpush1.msra.mxu0 0.0
        %579 = vmatprep.subr.mxu0 0.0
        %580 = vmatpush1.msra.mxu0 0.0
        %581 = vmatprep.subr.mxu0 0.0
        %582 = vmatpush1.msra.mxu0 0.0
        %583 = vmatprep.subr.mxu0 0.0
        %584 = vmatpush1.msra.mxu0 0.0
        %585 = vmatprep.subr.mxu0 0.0
        %586 = vmatpush1.msra.mxu0 0.0
        %587 = vmatprep.subr.mxu0 0.0
        %588 = vmatpush1.msra.mxu0 0.0
        %589 = vmatprep.subr.mxu0 0.0
        %590 = vmatpush1.msra.mxu0 %v564
        %591 = vmatprep.subr.mxu0 0.0
        %592 = vmatpush1.msra.mxu0 %v563
        %593 = vmatprep.subr.mxu0 0.0
        %594 = vmatpush1.msra.mxu0 %v562
        %595 = vmatprep.subr.mxu0 0.0
        %596 = vmatpush1.msra.mxu0 %v561
        %597 = vmatprep.subr.mxu0 0.0
        %598 = vmatpush2.msra.mxu0 0.0
        %599 = vmatprep.subr.mxu0 0.0
        %600 = vmatpush2.msra.mxu0 0.0
        %601 = vmatprep.subr.mxu0 0.0
        %602 = vmatpush2.msra.mxu0 0.0
        %603 = vmatprep.subr.mxu0 0.0
        %604 = vmatpush2.msra.mxu0 0.0
        %605 = vmatprep.subr.mxu0 0.0
        %606 = vmatpush2.msra.mxu0 0.0
        %607 = vmatprep.subr.mxu0 0.0
        %608 = vmatpush2.msra.mxu0 0.0
        %609 = vmatprep.subr.mxu0 0.0
        %610 = vmatpush2.msra.mxu0 0.0
        %611 = vmatprep.subr.mxu0 0.0
        %612 = vmatpush2.msra.mxu0 0.0
        %613 = vmatprep.subr.mxu0 0.0
        %614 = vmatpush2.msra.mxu0 0.0
        %615 = vmatprep.subr.mxu0 0.0
        %616 = vmatpush2.msra.mxu0 0.0
        %617 = vmatprep.subr.mxu0 0.0
        %618 = vmatpush2.msra.mxu0 0.0
        %619 = vmatprep.subr.mxu0 0.0
        %620 = vmatpush2.msra.mxu0 0.0
        %621 = vmatprep.subr.mxu0 0.0
        %622 = vmatpush2.msra.mxu0 0.0
        %623 = vmatprep.subr.mxu0 0.0
        %624 = vmatpush2.msra.mxu0 0.0
        %625 = vmatprep.subr.mxu0 0.0
        %626 = vmatpush2.msra.mxu0 0.0
        %627 = vmatprep.subr.mxu0 0.0
        %628 = vmatpush2.msra.mxu0 0.0
        %629 = vmatprep.mubr.f32.mxu0 0.0
        %630 = vmatmul.mubr.f32.gmra.mxu0 %v481
        %v631 = vpop.f32.mrf.mxu0
        %v632 = vadd.f32 0.0, %v631
        %v633 = vpop.f32.mrf.mxu0
        %634 = vmatprep.mubr.f32.mxu0 0.0
        %635 = vmatmul.mubr.f32.gmra.mxu0 %v484
        %v636 = vpop.f32.mrf.mxu0
        %v637 = vadd.f32 0.0, %v636
        %v638 = vpop.f32.mrf.mxu0
        %639 = vdwg.mxu0
        %vm640 = vcmask 130048
        %641 = vst.msk [vmem:[%s380] sm:$0xff] %vm640, %v473
        %642 = vst.msk [vmem:[%s387] sm:$0xff] %vm640, %v553
        %643 = vst.msk [vmem:[%s387 + $0x8] sm:$0xff] %vm640, %v558
        %644 = vst.msk [vmem:[%s394] sm:$0xff] %vm640, %v632
        %645 = vst.msk [vmem:[%s394 + $0x8] sm:$0xff] %vm640, %v637
        %647 = vrot.lane.b32.xlu0 %v473, 112
        %v648 = vpop.permute.xlu0 %647
        %s650 = scalar_lea.vmem %s380, 8 [#allocation11]
        %651 = vst.msk [vmem:[%s650] sm:$0xff] %vm640, %v648
        %654 = vrot.lane.b32.xlu0 %v553, 112
        %v655 = vpop.permute.xlu0 %654
        %656 = vrot.lane.b32.xlu0 %v558, 112
        %v657 = vpop.permute.xlu0 %656
        %s660 = scalar_lea.vmem %s387, 16 [#allocation12]
        %661 = vst.msk [vmem:[%s660] sm:$0xff] %vm640, %v655
        %662 = vst.msk [vmem:[%s660 + $0x8] sm:$0xff] %vm640, %v657
        %665 = vrot.lane.b32.xlu0 %v632, 112
        %v666 = vpop.permute.xlu0 %665
        %667 = vrot.lane.b32.xlu0 %v637, 112
        %v668 = vpop.permute.xlu0 %667
        %s671 = scalar_lea.vmem %s394, 16 [#allocation14]
        %672 = vst.msk [vmem:[%s671] sm:$0xff] %vm640, %v666
        %673 = vst.msk [vmem:[%s671 + $0x8] sm:$0xff] %vm640, %v668
        %674 = vrot.lane.b32.xlu0 %v473, 96
        %v675 = vpop.permute.xlu0 %674
        %s677 = scalar_lea.vmem %s380, 16 [#allocation11]
        %678 = vst.msk [vmem:[%s677] sm:$0xff] %vm640, %v675
        %679 = vrot.lane.b32.xlu0 %v553, 96
        %v680 = vpop.permute.xlu0 %679
        %681 = vrot.lane.b32.xlu0 %v558, 96
        %v682 = vpop.permute.xlu0 %681
        %s685 = scalar_lea.vmem %s387, 32 [#allocation12]
        %686 = vst.msk [vmem:[%s685] sm:$0xff] %vm640, %v680
        %687 = vst.msk [vmem:[%s685 + $0x8] sm:$0xff] %vm640, %v682
        %688 = vrot.lane.b32.xlu0 %v632, 96
        %v689 = vpop.permute.xlu0 %688
        %690 = vrot.lane.b32.xlu0 %v637, 96
        %v691 = vpop.permute.xlu0 %690
        %s694 = scalar_lea.vmem %s394, 32 [#allocation14]
        %695 = vst.msk [vmem:[%s694] sm:$0xff] %vm640, %v689
        %696 = vst.msk [vmem:[%s694 + $0x8] sm:$0xff] %vm640, %v691
        %697 = vrot.lane.b32.xlu0 %v473, 80
        %v698 = vpop.permute.xlu0 %697
        %s700 = scalar_lea.vmem %s380, 24 [#allocation11]
        %701 = vst.msk [vmem:[%s700] sm:$0xff] %vm640, %v698
        %702 = vrot.lane.b32.xlu0 %v553, 80
        %v703 = vpop.permute.xlu0 %702
        %704 = vrot.lane.b32.xlu0 %v558, 80
        %v705 = vpop.permute.xlu0 %704
        %s708 = scalar_lea.vmem %s387, 48 [#allocation12]
        %709 = vst.msk [vmem:[%s708] sm:$0xff] %vm640, %v703
        %710 = vst.msk [vmem:[%s708 + $0x8] sm:$0xff] %vm640, %v705
        %711 = vrot.lane.b32.xlu0 %v632, 80
        %v712 = vpop.permute.xlu0 %711
        %713 = vrot.lane.b32.xlu0 %v637, 80
        %v714 = vpop.permute.xlu0 %713
        %s717 = scalar_lea.vmem %s394, 48 [#allocation14]
        %718 = vst.msk [vmem:[%s717] sm:$0xff] %vm640, %v712
        %719 = vst.msk [vmem:[%s717 + $0x8] sm:$0xff] %vm640, %v714
        %s720 = sand.u32 %s155, 1
        %s721 = scalar_lea.sflag [#allocation4], %s720
        %s722 = sand.u32 %s155, 1
        %s723 = smul.addr %s722, 32
        %s724 = scalar_lea.vmem [#allocation11], %s723
        %s725 = sand.u32 %s32, 1
        %s726 = scalar_lea.sflag [#allocation13], %s725
        %s727 = sand.u32 %s181, 1
        %s728 = smul.addr %s727, 64
        %s729 = scalar_lea.vmem [#allocation12], %s728
        %s730 = sand.u32 %s32, 1
        %s731 = scalar_lea.sflag [#allocation13], %s730
        %s732 = sand.u32 %s207, 1
        %s733 = smul.addr %s732, 64
        %s734 = scalar_lea.vmem [#allocation14], %s733
        // Predicated region
        $region61: #{tpu_custom_call.1} parent=39 // pred_check
          %p735 = pneg %p165
        $region62: #{tpu_custom_call.1} parent=39 // pred_check_branch
          %737 = sbr.rel (%p735) target = $region64
        $region63: #{tpu_custom_call.1} parent=39 // pred_region
          %s739 = ssub.s32 512, 512
          %740 = vsyncadd %s721, %s739
          %s741 = smul.addr %s32, 4
          %s742 = smul.addr %s741, 128
          %s743 = scalar_lea.hbm %s5, %s742
          %s744 = sshll.u32 %s724, 4
          %s745 = int_to_ptr.vmem [resolvable:$true] %s744
          %750 = dma.vmem_to_hbm [thread:$0]  %s745, 512, %s743, %s721, 128, 128, 8
        $region64: #{tpu_custom_call.1} parent=39 // pred_fallthru
          _
        // Predicated region
        $region65: #{tpu_custom_call.1} parent=39 // pred_check
          %p751 = pneg %p191
        $region66: #{tpu_custom_call.1} parent=39 // pred_check_branch
          %753 = sbr.rel (%p751) target = $region68
        $region67: #{tpu_custom_call.1} parent=39 // pred_region
          %s755 = ssub.s32 1024, 1024
          %756 = vsyncadd %s726, %s755
          %s757 = smul.addr %s32, 8
          %s758 = smul.addr %s757, 128
          %s759 = scalar_lea.hbm %s6, %s758
          %s760 = sshll.u32 %s729, 4
          %s761 = int_to_ptr.vmem [resolvable:$true] %s760
          %766 = dma.vmem_to_hbm [thread:$0]  %s761, 1024, %s759, %s726, 128, 128, 8
        $region68: #{tpu_custom_call.1} parent=39 // pred_fallthru
          _
        // Predicated region
        $region69: #{tpu_custom_call.1} parent=39 // pred_check
          %p767 = pneg %p217
        $region70: #{tpu_custom_call.1} parent=39 // pred_check_branch
          %769 = sbr.rel (%p767) target = $region72
        $region71: #{tpu_custom_call.1} parent=39 // pred_region
          %s771 = ssub.s32 1024, 1024
          %772 = vsyncadd %s731, %s771
          %s773 = smul.addr %s32, 8
          %s774 = smul.addr %s773, 128
          %s775 = scalar_lea.hbm %s7, %s774
          %s776 = sshll.u32 %s734, 4
          %s777 = int_to_ptr.vmem [resolvable:$true] %s776
          %782 = dma.vmem_to_hbm [thread:$0]  %s777, 1024, %s775, %s731, 128, 128, 8
        $region72: #{tpu_custom_call.1} parent=39 // pred_fallthru
          _
      $region40: #{tpu_custom_call.1} parent=5 // pred_fallthru
        _
      %p783 = scmp.le.s32.totalorder 2, %s27
      // Predicated region
      $region73: #{tpu_custom_call.1} parent=5 // pred_check
        %p784 = pneg %p783
      $region74: #{tpu_custom_call.1} parent=5 // pred_check_branch
        %786 = sbr.rel (%p784) target = $region76
      $region75: #{tpu_custom_call.1} parent=5 // pred_region
        %s787 = ssub.s32 %s27, 2
        // Predicated region
        $region77: #{tpu_custom_call.1} parent=75 // pred_check
          %p788 = pneg %p171
        $region78: #{tpu_custom_call.1} parent=75 // pred_check_branch
          %790 = sbr.rel (%p788) target = $region80
        $region79: #{tpu_custom_call.1} parent=75 // pred_region
          %s791 = sand.u32 %s156, 1
          %s792 = scalar_lea.sflag [#allocation4], %s791
          %s793 = sand.u32 %s156, 1
          %s794 = smul.addr %s793, 32
          %s795 = scalar_lea.vmem [#allocation11], %s794
          %796 = dma.done %s792, 512
        $region80: #{tpu_custom_call.1} parent=75 // pred_fallthru
          _
        // Predicated region
        $region81: #{tpu_custom_call.1} parent=75 // pred_check
          %p797 = pneg %p197
        $region82: #{tpu_custom_call.1} parent=75 // pred_check_branch
          %799 = sbr.rel (%p797) target = $region84
        $region83: #{tpu_custom_call.1} parent=75 // pred_region
          %s800 = sand.u32 %s33, 1
          %s801 = scalar_lea.sflag [#allocation13], %s800
          %s802 = sand.u32 %s182, 1
          %s803 = smul.addr %s802, 64
          %s804 = scalar_lea.vmem [#allocation12], %s803
          %805 = dma.done %s801, 1024
        $region84: #{tpu_custom_call.1} parent=75 // pred_fallthru
          _
        // Predicated region
        $region85: #{tpu_custom_call.1} parent=75 // pred_check
          %p806 = pneg %p223
        $region86: #{tpu_custom_call.1} parent=75 // pred_check_branch
          %808 = sbr.rel (%p806) target = $region88
        $region87: #{tpu_custom_call.1} parent=75 // pred_region
          %s809 = sand.u32 %s33, 1
          %s810 = scalar_lea.sflag [#allocation13], %s809
          %s811 = sand.u32 %s208, 1
          %s812 = smul.addr %s811, 64
          %s813 = scalar_lea.vmem [#allocation14], %s812
          %814 = dma.done %s810, 1024
        $region88: #{tpu_custom_call.1} parent=75 // pred_fallthru
          _
      $region76: #{tpu_custom_call.1} parent=5 // pred_fallthru
        _
    $region6: #{tpu_custom_call.1} parent=1 // loop_footer
      %s31 = sadd.s32 1, %s27
    $region7: #{tpu_custom_call.1} parent=1 // loop_footer_branch
      %26 = sbr.rel target = $region3
    $region8: #{tpu_custom_call.1} parent=1 // loop_exit
      _
    %815 = vsyncpa [#allocation3], 1
    %s816 = scalar_lea.sflag [#allocation3], 1
    %817 = vsyncpa %s816, 1
    %818 = vsyncpa [#allocation6], 1
    %s819 = scalar_lea.sflag [#allocation6], 1
    %820 = vsyncpa %s819, 1
    %821 = vsyncpa [#allocation9], 1
    %822 = vsyncpa [#allocation4], 1
    %s823 = scalar_lea.sflag [#allocation4], 1
    %824 = vsyncpa %s823, 1
    %825 = vsyncpa [#allocation13], 1
    %s826 = scalar_lea.sflag [#allocation13], 1
    %827 = vsyncpa %s826, 1

</llo_original>
